<compile_context>
chip_gen: v7x
topology: tpu7x:2x2x1
jax: 0.10.0
libtpu: 0.0.40
codegen_flags: <defaults>
</compile_context>

<pallas_src>
import jax
import jax.numpy as jnp
from jax.experimental import pallas as pl
from jax.experimental.pallas import tpu as pltpu


def ae_kernel(x_ref, w_enc_ref, b_enc_ref, w_dec_ref, b_dec_ref, out_ref):
    """Fused AE forward on one batch tile.

    encoder: h = x @ w_enc.T + b_enc     (w_enc: (H, D), H == 3)
    decoder: y = h @ w_dec   + b_dec     (w_dec: (H, D))

    With H == 3 both contractions are done on the VPU/XLU (per-row reduce +
    broadcast-FMA) instead of feeding rank-3 matmuls to the MXU.
    """
    x = x_ref[...]                          # (bm, D) f32
    w_enc = w_enc_ref[...]                  # (H, D)
    w_dec = w_dec_ref[...]                  # (H, D)
    h_dim = w_enc.shape[0]                  # static (== 3)

    acc = jnp.zeros(x.shape, jnp.float32)
    for k in range(h_dim):                  # H == 3, fully unrolled at trace time
        # encoder row k: h_k[b] = sum_d x[b, d] * w_enc[k, d] + b_enc[k] -> (bm, 1)
        h_k = jnp.sum(x * w_enc[k:k + 1, :], axis=-1, keepdims=True) + b_enc_ref[k]
        # decoder contribution: (bm, 1) * (1, D) broadcast-FMA -> (bm, D)
        acc = acc + h_k * w_dec[k:k + 1, :]

    out_ref[...] = (acc + b_dec_ref[...]).astype(out_ref.dtype)


def _choose_bm(B, D, tile_budget_bytes=12 * 1024 * 1024):
    """Largest batch tile under a VMEM budget (double-buffered x + out tiles)."""
    # double-buffered x + out tiles ~= 4 * bm * D * 4 bytes
    cap = max(8, tile_budget_bytes // (16 * D))
    bm = None
    for cand in (4096, 2048, 1024, 512, 256, 128, 64, 32, 16, 8):
        if cand <= B and cand <= cap and B % cand == 0:
            bm = cand
            break
    if bm is None:
        bm = B  # full-extent block is always legal
    # Keep >= 2 grid steps when possible so megacore (v7x) can shard the batch.
    if bm == B and B >= 16 and (B // 2) % 8 == 0:
        bm = B // 2
    return bm


def ae_forward(x, w_enc, b_enc, w_dec, b_dec, *, bm=None):
    """AE forward pass: x (B, D) -> decoded (B, D).

    w_enc: (H, D)  == PyTorch encoder.weight        (H == 3)
    b_enc: (H,)    == PyTorch encoder.bias
    w_dec: (H, D)  == PyTorch decoder.weight.T
    b_dec: (1, D)  == PyTorch decoder.bias
    """
    B, D = x.shape
    H = w_enc.shape[0]
    if bm is None:
        bm = _choose_bm(B, D)
    assert B % bm == 0
    grid = (B // bm,)

    itemsize = jnp.dtype(x.dtype).itemsize
    bytes_accessed = (2 * B * D + 2 * H * D + H + D) * itemsize
    flops = 4 * B * D * H  # two rank-H contractions, 2 flops per MAC

    # Explicit VMEM budget (matters on v7x's smaller 64 MiB VMEM).
    vmem_need = (4 * bm * D + 4 * H * D + 2 * D) * 4
    vmem_limit = min(max(int(1.5 * vmem_need) + (4 << 20), 16 << 20), 48 << 20)

    return pl.pallas_call(
        ae_kernel,
        out_shape=jax.ShapeDtypeStruct((B, D), x.dtype),
        grid_spec=pltpu.PrefetchScalarGridSpec(
            num_scalar_prefetch=0,
            grid=grid,
            in_specs=[
                pl.BlockSpec((bm, D), lambda i: (i, 0)),              # x tile
                pl.BlockSpec((H, D), lambda i: (0, 0)),               # encoder weight (lane-dense)
                pl.BlockSpec(memory_space=pltpu.MemorySpace.SMEM),    # encoder bias (3 scalars)
                pl.BlockSpec((H, D), lambda i: (0, 0)),               # decoder weight (lane-dense)
                pl.BlockSpec((1, D), lambda i: (0, 0)),               # decoder bias
            ],
            out_specs=pl.BlockSpec((bm, D), lambda i: (i, 0)),
        ),
        compiler_params=pltpu.CompilerParams(
            dimension_semantics=("parallel",),
            vmem_limit_bytes=vmem_limit,
        ),
        cost_estimate=pl.CostEstimate(
            flops=flops, transcendentals=0, bytes_accessed=bytes_accessed),
    )(x, w_enc, b_enc, w_dec, b_dec)


def init_ae_params(key, input_dim, hidden=3):
    """Deterministic init mimicking nn.Linear (uniform +/- 1/sqrt(fan_in)).

    Weights are stored lane-dense as (hidden, input_dim).
    """
    k1, k2, k3, k4 = jax.random.split(key, 4)
    bound_enc = 1.0 / jnp.sqrt(jnp.float32(input_dim))
    bound_dec = 1.0 / jnp.sqrt(jnp.float32(hidden))
    w_enc = jax.random.uniform(k1, (hidden, input_dim), jnp.float32,
                               -bound_enc, bound_enc)   # encoder.weight
    b_enc = jax.random.uniform(k2, (hidden,), jnp.float32,
                               -bound_enc, bound_enc)   # encoder.bias
    w_dec = jax.random.uniform(k3, (hidden, input_dim), jnp.float32,
                               -bound_dec, bound_dec)   # decoder.weight.T
    b_dec = jax.random.uniform(k4, (1, input_dim), jnp.float32,
                               -bound_dec, bound_dec)   # decoder.bias
    return w_enc, b_enc, w_dec, b_dec


if __name__ == "__main__":
    key = jax.random.PRNGKey(0)
    kx, kp = jax.random.split(key)

    B, D, H = 256, 128, 3        # batch=256, input_dim=128 (lane-dense), hidden=3
    x = jax.random.normal(kx, (B, D), jnp.float32)
    w_enc, b_enc, w_dec, b_dec = init_ae_params(kp, D, hidden=H)

    out = ae_forward(x, w_enc, b_enc, w_dec, b_dec)
    out = jax.block_until_ready(out)

    # Pure-JAX reference of decoder(encoder(x)).
    h_ref = x @ w_enc.T + b_enc
    ref = h_ref @ w_dec + b_dec
    assert out.shape == (B, D)
    assert jnp.allclose(out, ref, atol=1e-4, rtol=1e-5), float(jnp.max(jnp.abs(out - ref)))

    # TODO(synk): nn.CrossEntropyLoss (self.criterion) is training-only and not part of forward().

    print("KERNEL_OK")
</pallas_src>

<mosaic_0001>
module attributes {stable_mosaic.version = 11 : i64} {
  func.func @ae_kernel(%arg0: i32, %arg1: memref<128x128xf32, #tpu.memory_space<vmem>>, %arg2: memref<3x128xf32, #tpu.memory_space<vmem>>, %arg3: memref<3xf32, #tpu.memory_space<smem>>, %arg4: memref<3x128xf32, #tpu.memory_space<vmem>>, %arg5: memref<1x128xf32, #tpu.memory_space<vmem>>, %arg6: memref<128x128xf32, #tpu.memory_space<vmem>>) attributes {dimension_semantics = [#tpu.dimension_semantics<parallel>], iteration_bounds = array<i64: 2>, scalar_prefetch = 0 : i64, scratch_operands = 0 : i64, tpu.core_type = #tpu.core_type<tc>, window_params = [{transform_indices = @transform_0, window_bounds = array<i64: 128, 128>}, {pipeline_mode = #tpu.pipeline_mode<synchronous>, transform_indices = @transform_1, window_bounds = array<i64: 3, 128>}, {transform_indices = @transform_2, window_bounds = array<i64: 3>}, {pipeline_mode = #tpu.pipeline_mode<synchronous>, transform_indices = @transform_3, window_bounds = array<i64: 3, 128>}, {pipeline_mode = #tpu.pipeline_mode<synchronous>, transform_indices = @transform_4, window_bounds = array<i64: 1, 128>}, {transform_indices = @transform_5, window_bounds = array<i64: 128, 128>}]} {
    %c0 = arith.constant 0 : index
    %c0_0 = arith.constant 0 : index
    %0 = vector.load %arg1[%c0, %c0_0] : memref<128x128xf32, #tpu.memory_space<vmem>>, vector<128x128xf32>
    %c0_1 = arith.constant 0 : index
    %c0_2 = arith.constant 0 : index
    %1 = vector.load %arg2[%c0_1, %c0_2] : memref<3x128xf32, #tpu.memory_space<vmem>>, vector<3x128xf32>
    %c0_3 = arith.constant 0 : index
    %c0_4 = arith.constant 0 : index
    %2 = vector.load %arg4[%c0_3, %c0_4] : memref<3x128xf32, #tpu.memory_space<vmem>>, vector<3x128xf32>
    %cst = arith.constant 0.000000e+00 : f32
    %3 = vector.broadcast %cst : f32 to vector<128x128xf32>
    %4 = vector.extract_strided_slice %1 {offsets = [0, 0], sizes = [1, 128], strides = [1, 1]} : vector<3x128xf32> to vector<1x128xf32>
    %5 = vector.broadcast %4 : vector<1x128xf32> to vector<128x128xf32>
    %6 = arith.mulf %0, %5 : vector<128x128xf32>
    %cst_5 = arith.constant dense<0.000000e+00> : vector<128xf32>
    %7 = vector.multi_reduction <add>, %6, %cst_5 [1] : vector<128x128xf32> to vector<128xf32>
    %8 = vector.shape_cast %7 : vector<128xf32> to vector<128x1xf32>
    %c0_6 = arith.constant 0 : index
    %9 = memref.load %arg3[%c0_6] : memref<3xf32, #tpu.memory_space<smem>>
    %10 = vector.broadcast %9 : f32 to vector<128x1xf32>
    %11 = arith.addf %8, %10 : vector<128x1xf32>
    %12 = vector.extract_strided_slice %2 {offsets = [0, 0], sizes = [1, 128], strides = [1, 1]} : vector<3x128xf32> to vector<1x128xf32>
    %13 = vector.broadcast %11 : vector<128x1xf32> to vector<128x128xf32>
    %14 = vector.broadcast %12 : vector<1x128xf32> to vector<128x128xf32>
    %15 = arith.mulf %13, %14 : vector<128x128xf32>
    %16 = arith.addf %3, %15 : vector<128x128xf32>
    %17 = vector.extract_strided_slice %1 {offsets = [1, 0], sizes = [1, 128], strides = [1, 1]} : vector<3x128xf32> to vector<1x128xf32>
    %18 = vector.broadcast %17 : vector<1x128xf32> to vector<128x128xf32>
    %19 = arith.mulf %0, %18 : vector<128x128xf32>
    %cst_7 = arith.constant dense<0.000000e+00> : vector<128xf32>
    %20 = vector.multi_reduction <add>, %19, %cst_7 [1] : vector<128x128xf32> to vector<128xf32>
    %21 = vector.shape_cast %20 : vector<128xf32> to vector<128x1xf32>
    %c1 = arith.constant 1 : index
    %22 = memref.load %arg3[%c1] : memref<3xf32, #tpu.memory_space<smem>>
    %23 = vector.broadcast %22 : f32 to vector<128x1xf32>
    %24 = arith.addf %21, %23 : vector<128x1xf32>
    %25 = vector.extract_strided_slice %2 {offsets = [1, 0], sizes = [1, 128], strides = [1, 1]} : vector<3x128xf32> to vector<1x128xf32>
    %26 = vector.broadcast %24 : vector<128x1xf32> to vector<128x128xf32>
    %27 = vector.broadcast %25 : vector<1x128xf32> to vector<128x128xf32>
    %28 = arith.mulf %26, %27 : vector<128x128xf32>
    %29 = arith.addf %16, %28 : vector<128x128xf32>
    %30 = vector.extract_strided_slice %1 {offsets = [2, 0], sizes = [1, 128], strides = [1, 1]} : vector<3x128xf32> to vector<1x128xf32>
    %31 = vector.broadcast %30 : vector<1x128xf32> to vector<128x128xf32>
    %32 = arith.mulf %0, %31 : vector<128x128xf32>
    %cst_8 = arith.constant dense<0.000000e+00> : vector<128xf32>
    %33 = vector.multi_reduction <add>, %32, %cst_8 [1] : vector<128x128xf32> to vector<128xf32>
    %34 = vector.shape_cast %33 : vector<128xf32> to vector<128x1xf32>
    %c2 = arith.constant 2 : index
    %35 = memref.load %arg3[%c2] : memref<3xf32, #tpu.memory_space<smem>>
    %36 = vector.broadcast %35 : f32 to vector<128x1xf32>
    %37 = arith.addf %34, %36 : vector<128x1xf32>
    %38 = vector.extract_strided_slice %2 {offsets = [2, 0], sizes = [1, 128], strides = [1, 1]} : vector<3x128xf32> to vector<1x128xf32>
    %39 = vector.broadcast %37 : vector<128x1xf32> to vector<128x128xf32>
    %40 = vector.broadcast %38 : vector<1x128xf32> to vector<128x128xf32>
    %41 = arith.mulf %39, %40 : vector<128x128xf32>
    %42 = arith.addf %29, %41 : vector<128x128xf32>
    %c0_9 = arith.constant 0 : index
    %c0_10 = arith.constant 0 : index
    %43 = vector.load %arg5[%c0_9, %c0_10] : memref<1x128xf32, #tpu.memory_space<vmem>>, vector<1x128xf32>
    %44 = vector.broadcast %43 : vector<1x128xf32> to vector<128x128xf32>
    %45 = arith.addf %42, %44 : vector<128x128xf32>
    %c0_11 = arith.constant 0 : index
    %c0_12 = arith.constant 0 : index
    %46 = vector.load %arg6[%c0_11, %c0_12] : memref<128x128xf32, #tpu.memory_space<vmem>>, vector<128x128xf32>
    tpu.vector_store %arg6[%c0_11, %c0_12], %45 {strides = array<i32>} : memref<128x128xf32, #tpu.memory_space<vmem>>, vector<128x128xf32>,
    return
  }
  func.func @transform_0(%arg0: i32) -> (i32, i32) {
    %c0_i32 = arith.constant 0 : i32
    %c0_i32_0 = arith.constant 0 : i32
    return %arg0, %c0_i32 : i32, i32
  }
  func.func @transform_1(%arg0: i32) -> (i32, i32) {
    %c0_i32 = arith.constant 0 : i32
    %c0_i32_0 = arith.constant 0 : i32
    %c0_i32_1 = arith.constant 0 : i32
    return %c0_i32, %c0_i32_0 : i32, i32
  }
  func.func @transform_2(%arg0: i32) -> i32 {
    %c0_i32 = arith.constant 0 : i32
    %c0_i32_0 = arith.constant 0 : i32
    return %c0_i32 : i32
  }
  func.func @transform_3(%arg0: i32) -> (i32, i32) {
    %c0_i32 = arith.constant 0 : i32
    %c0_i32_0 = arith.constant 0 : i32
    %c0_i32_1 = arith.constant 0 : i32
    return %c0_i32, %c0_i32_0 : i32, i32
  }
  func.func @transform_4(%arg0: i32) -> (i32, i32) {
    %c0_i32 = arith.constant 0 : i32
    %c0_i32_0 = arith.constant 0 : i32
    %c0_i32_1 = arith.constant 0 : i32
    return %c0_i32, %c0_i32_0 : i32, i32
  }
  func.func @transform_5(%arg0: i32) -> (i32, i32) {
    %c0_i32 = arith.constant 0 : i32
    %c0_i32_0 = arith.constant 0 : i32
    return %arg0, %c0_i32 : i32, i32
  }
}

</mosaic_0001>

<llo_original>
// kernel: tpu_custom_call.1
$region0: #{tpu_custom_call.1}
  #allocation0 [shape = 'u32[]', space=smem, size = 0x4, offset = 0x4, fixed_abs, tag = 'smem constant byte address 0x4 - core index']
  #allocation1 [shape = 'u32[144,128]{1,0:T(1,128)}', space=vmem, size = 0x12000, scoped, tag = 'internal scratch']
  %s0 = inlined_call_operand.hbm [shape: f32[256,128], index: 0, kind: input, shape index: {}]
  %s1 = inlined_call_operand.hbm [shape: f32[3,128], index: 1, kind: input, shape index: {}]
  %s2 = inlined_call_operand.vmem [shape: f32[3], index: 2, kind: input, shape index: {}]
  %s3 = inlined_call_operand.vmem [shape: f32[3,128], index: 3, kind: input, shape index: {}]
  %s4 = inlined_call_operand.vmem [shape: f32[1,128], index: 4, kind: input, shape index: {}]
  %s5 = inlined_call_operand.hbm [shape: f32[256,128], index: 5, kind: output, shape index: {}]
  %s6 = sld [smem:[#allocation0]]
  $region65: #{tpu_custom_call.1} parent=0
    _
  %s8 = ssub.s32 1, %s6
  %s9 = scalar_select 0, %s8, %s6
  $region1: #{tpu_custom_call.1} parent=0
    #allocation2 [shape = 'u8[131072]{0}', space=vmem, size = 0x20000, scoped, tag = 'input window, operand 0']
    #allocation3 [shape = 's32[2]{0}', space=sflag, size = 0x8, scoped, tag = 'scoped memory for tpu_custom_call.1']
    #allocation4 [shape = 's32[2]{0}', space=sflag, size = 0x8, scoped, tag = 'scoped memory for tpu_custom_call.1']
    #allocation5 [shape = 's32[2]{0}', space=sflag, size = 0x8, scoped, tag = 'scoped memory for tpu_custom_call.1']
    #allocation6 [shape = 'u8[2048]{0}', space=vmem, size = 0x800, scoped, tag = 'input window, operand 1, single buffered']
    #allocation7 [shape = 's32[1]{0}', space=sflag, size = 0x4, scoped, tag = 'scoped memory for tpu_custom_call.1']
    #allocation8 [shape = 'u8[512]{0}', space=smem, size = 0x200, scoped, tag = 'input window, operand 2, single buffered']
    #allocation9 [shape = 'u8[131072]{0}', space=vmem, size = 0x20000, scoped, tag = 'output window, operand 0']
    %10 = vsyncpa [#allocation3], 0
    %s11 = scalar_lea.sflag [#allocation3], 1
    %12 = vsyncpa %s11, 0
    %13 = vsyncpa [#allocation7], 0
    %14 = vsyncpa [#allocation5], 0
    %15 = vsyncpa [#allocation4], 0
    %s16 = scalar_lea.sflag [#allocation4], 1
    %17 = vsyncpa %s16, 0
    loop: start=0, step=1, limit=4
    $region2: #{tpu_custom_call.1} parent=1 // loop_pre_header
      _
    $region3: #{tpu_custom_call.1} parent=1 // loop_header
      %s19 = sphi 0, %s23
      %p20 = scmp.ge.s32.totalorder %s19, 4
      %s29 = sphi 0, %s31
      %s32 = sphi 0, %s29
      %s33 = sphi 0, %s32
      %s49 = sphi 0, %s33
      %s53 = sphi 0, %s53
      %s55 = sphi 0, %s53
      %s56 = sphi 0, %s55
      %s70 = sphi 0, %s56
      %s74 = sphi 0, %s74
      %s76 = sphi 0, %s74
      %s77 = sphi 0, %s76
      %s91 = sphi 0, %s77
      %s95 = sphi 0, %s95
      %s97 = sphi 0, %s95
      %s98 = sphi 0, %s97
      %s112 = sphi 0, %s98
      %s116 = sphi 0, %s116
      %s118 = sphi 0, %s116
      %s119 = sphi 0, %s118
      %s133 = sphi 0, %s119
      %s139 = sphi 0, %s141
      %s142 = sphi 0, %s139
      %s143 = sphi 0, %s142
      %s159 = sphi 0, %s143
    $region4: #{tpu_custom_call.1} parent=1 // loop_header_branch
      %22 = sbr.rel (%p20) target = $region8
    $region5: #{tpu_custom_call.1} parent=1 // loop_body
      %s24 = ssub.s32 %s19, 1
      %s25 = ssub.s32 %s19, 2
      %s26 = sadd.s32 %s19, 1
      %s27 = ssub.s32 %s19, %s26
      %p28 = scmp.eq.s32.totalorder %s27, 0
      %s30 = sadd.s32 %s29, 1
      %s31 = scalar_select %p28, %s29, %s30
      %p34 = pneg %p28
      %p35 = scmp.eq.s32.totalorder %s19, 1
      %p36 = por %p34, %p35
      %p37 = scmp.ne.s32.totalorder %s29, %s32
      %p38 = scmp.eq.s32.totalorder %s19, 0
      %p39 = por %p37, %p38
      %p40 = scmp.ne.s32.totalorder %s29, %s32
      %p41 = scmp.eq.s32.totalorder %s24, 1
      %p42 = por %p40, %p41
      %p43 = scmp.ne.s32.totalorder %s32, %s33
      %p44 = scmp.eq.s32.totalorder %s24, 0
      %p45 = por %p43, %p44
      %p46 = scmp.ne.s32.totalorder %s32, %s33
      %p47 = scmp.eq.s32.totalorder %s25, 1
      %p48 = por %p46, %p47
      %p50 = scmp.ne.s32.totalorder %s33, %s49
      %p51 = scmp.eq.s32.totalorder %s25, 0
      %p52 = por %p50, %p51
      %s54 = sadd.s32 %s53, 1
      %p57 = scmp.eq.s32.totalorder %s19, 1
      %p58 = scmp.ne.s32.totalorder %s53, %s55
      %p59 = scmp.eq.s32.totalorder %s19, 0
      %p60 = por %p58, %p59
      %p61 = scmp.ne.s32.totalorder %s53, %s55
      %p62 = scmp.eq.s32.totalorder %s24, 1
      %p63 = por %p61, %p62
      %p64 = scmp.ne.s32.totalorder %s55, %s56
      %p65 = scmp.eq.s32.totalorder %s24, 0
      %p66 = por %p64, %p65
      %p67 = scmp.ne.s32.totalorder %s55, %s56
      %p68 = scmp.eq.s32.totalorder %s25, 1
      %p69 = por %p67, %p68
      %p71 = scmp.ne.s32.totalorder %s56, %s70
      %p72 = scmp.eq.s32.totalorder %s25, 0
      %p73 = por %p71, %p72
      %s75 = sadd.s32 %s74, 1
      %p78 = scmp.eq.s32.totalorder %s19, 1
      %p79 = scmp.ne.s32.totalorder %s74, %s76
      %p80 = scmp.eq.s32.totalorder %s19, 0
      %p81 = por %p79, %p80
      %p82 = scmp.ne.s32.totalorder %s74, %s76
      %p83 = scmp.eq.s32.totalorder %s24, 1
      %p84 = por %p82, %p83
      %p85 = scmp.ne.s32.totalorder %s76, %s77
      %p86 = scmp.eq.s32.totalorder %s24, 0
      %p87 = por %p85, %p86
      %p88 = scmp.ne.s32.totalorder %s76, %s77
      %p89 = scmp.eq.s32.totalorder %s25, 1
      %p90 = por %p88, %p89
      %p92 = scmp.ne.s32.totalorder %s77, %s91
      %p93 = scmp.eq.s32.totalorder %s25, 0
      %p94 = por %p92, %p93
      %s96 = sadd.s32 %s95, 1
      %p99 = scmp.eq.s32.totalorder %s19, 1
      %p100 = scmp.ne.s32.totalorder %s95, %s97
      %p101 = scmp.eq.s32.totalorder %s19, 0
      %p102 = por %p100, %p101
      %p103 = scmp.ne.s32.totalorder %s95, %s97
      %p104 = scmp.eq.s32.totalorder %s24, 1
      %p105 = por %p103, %p104
      %p106 = scmp.ne.s32.totalorder %s97, %s98
      %p107 = scmp.eq.s32.totalorder %s24, 0
      %p108 = por %p106, %p107
      %p109 = scmp.ne.s32.totalorder %s97, %s98
      %p110 = scmp.eq.s32.totalorder %s25, 1
      %p111 = por %p109, %p110
      %p113 = scmp.ne.s32.totalorder %s98, %s112
      %p114 = scmp.eq.s32.totalorder %s25, 0
      %p115 = por %p113, %p114
      %s117 = sadd.s32 %s116, 1
      %p120 = scmp.eq.s32.totalorder %s19, 1
      %p121 = scmp.ne.s32.totalorder %s116, %s118
      %p122 = scmp.eq.s32.totalorder %s19, 0
      %p123 = por %p121, %p122
      %p124 = scmp.ne.s32.totalorder %s116, %s118
      %p125 = scmp.eq.s32.totalorder %s24, 1
      %p126 = por %p124, %p125
      %p127 = scmp.ne.s32.totalorder %s118, %s119
      %p128 = scmp.eq.s32.totalorder %s24, 0
      %p129 = por %p127, %p128
      %p130 = scmp.ne.s32.totalorder %s118, %s119
      %p131 = scmp.eq.s32.totalorder %s25, 1
      %p132 = por %p130, %p131
      %p134 = scmp.ne.s32.totalorder %s119, %s133
      %p135 = scmp.eq.s32.totalorder %s25, 0
      %p136 = por %p134, %p135
      %s137 = ssub.s32 %s19, %s26
      %p138 = scmp.eq.s32.totalorder %s137, 0
      %s140 = sadd.s32 %s139, 1
      %s141 = scalar_select %p138, %s139, %s140
      %p144 = pneg %p138
      %p145 = scmp.eq.s32.totalorder %s19, 1
      %p146 = por %p144, %p145
      %p147 = scmp.ne.s32.totalorder %s139, %s142
      %p148 = scmp.eq.s32.totalorder %s19, 0
      %p149 = por %p147, %p148
      %p150 = scmp.ne.s32.totalorder %s139, %s142
      %p151 = scmp.eq.s32.totalorder %s24, 1
      %p152 = por %p150, %p151
      %p153 = scmp.ne.s32.totalorder %s142, %s143
      %p154 = scmp.eq.s32.totalorder %s24, 0
      %p155 = por %p153, %p154
      %p156 = scmp.ne.s32.totalorder %s142, %s143
      %p157 = scmp.eq.s32.totalorder %s25, 1
      %p158 = por %p156, %p157
      %p160 = scmp.ne.s32.totalorder %s143, %s159
      %p161 = scmp.eq.s32.totalorder %s25, 0
      %p162 = por %p160, %p161
      %p163 = scmp.le.s32.totalorder 1, %s19
      %p164 = scmp.lt.s32.totalorder %s19, 3
      %p165 = pnand %p163, %p164
      %p166 = pneg %p165
      // Predicated region
      $region9: #{tpu_custom_call.1} parent=5 // pred_check
        _
      $region10: #{tpu_custom_call.1} parent=5 // pred_check_branch
        %168 = sbr.rel (%p165) target = $region12
      $region11: #{tpu_custom_call.1} parent=5 // pred_region
        %s169 = ssub.s32 %s19, 1
        // Predicated region
        $region13: #{tpu_custom_call.1} parent=11 // pred_check
          %p170 = pneg %p66
        $region14: #{tpu_custom_call.1} parent=11 // pred_check_branch
          %172 = sbr.rel (%p170) target = $region16
        $region15: #{tpu_custom_call.1} parent=11 // pred_region
          %s174 = ssub.s32 64, 64
          %175 = vsyncadd [#allocation7], %s174
          %s177 = sshll.u32 [#allocation6], 4
          %s178 = int_to_ptr.vmem [resolvable:$true] %s177
          %180 = dma.hbm_to_vmem [thread:$0]  %s1, 64, %s178, [#allocation7]
        $region16: #{tpu_custom_call.1} parent=11 // pred_fallthru
          _
        // Predicated region
        $region17: #{tpu_custom_call.1} parent=11 // pred_check
          %p181 = pneg %p87
        $region18: #{tpu_custom_call.1} parent=11 // pred_check_branch
          %183 = sbr.rel (%p181) target = $region20
        $region19: #{tpu_custom_call.1} parent=11 // pred_region
          %s185 = ssub.s32 16, 16
          %186 = vsyncadd [#allocation5], %s185
          %s188 = sshll.u32 %s2, 4
          %s189 = int_to_ptr.vmem [resolvable:$true] %s188
          %191 = dma.vmem_to_smem %s189, 16, [#allocation8], [#allocation5]
        $region20: #{tpu_custom_call.1} parent=11 // pred_fallthru
          _
        // Predicated region
        $region21: #{tpu_custom_call.1} parent=11 // pred_check
          %p192 = pneg %p108
        $region22: #{tpu_custom_call.1} parent=11 // pred_check_branch
          %194 = sbr.rel (%p192) target = $region24
        $region23: #{tpu_custom_call.1} parent=11 // pred_region
          _
        $region24: #{tpu_custom_call.1} parent=11 // pred_fallthru
          _
        // Predicated region
        $region25: #{tpu_custom_call.1} parent=11 // pred_check
          %p195 = pneg %p129
        $region26: #{tpu_custom_call.1} parent=11 // pred_check_branch
          %197 = sbr.rel (%p195) target = $region28
        $region27: #{tpu_custom_call.1} parent=11 // pred_region
          _
        $region28: #{tpu_custom_call.1} parent=11 // pred_fallthru
          _
      $region12: #{tpu_custom_call.1} parent=5 // pred_fallthru
        _
      %p198 = scmp.lt.s32.totalorder %s19, 2
      // Predicated region
      $region29: #{tpu_custom_call.1} parent=5 // pred_check
        %p199 = pneg %p198
      $region30: #{tpu_custom_call.1} parent=5 // pred_check_branch
        %201 = sbr.rel (%p199) target = $region32
      $region31: #{tpu_custom_call.1} parent=5 // pred_region
        // Predicated region
        $region33: #{tpu_custom_call.1} parent=31 // pred_check
          %p202 = pneg %p39
        $region34: #{tpu_custom_call.1} parent=31 // pred_check_branch
          %204 = sbr.rel (%p202) target = $region36
        $region35: #{tpu_custom_call.1} parent=31 // pred_region
          %s205 = sand.u32 %s29, 1
          %s206 = scalar_lea.sflag [#allocation3], %s205
          %s207 = sand.u32 %s29, 1
          %s208 = smul.addr %s207, 128
          %s209 = scalar_lea.vmem [#allocation2], %s208
          %s210 = smul.u32 16, %s19
          %s212 = ssub.s32 2048, 2048
          %213 = vsyncadd %s206, %s212
          %s214 = smul.addr %s210, 128
          %s215 = scalar_lea.hbm %s0, %s214
          %s216 = sshll.u32 %s209, 4
          %s217 = int_to_ptr.vmem [resolvable:$true] %s216
          %222 = dma.hbm_to_vmem [thread:$0]  %s215, 2048, %s217, %s206, 128, 128, 8
        $region36: #{tpu_custom_call.1} parent=31 // pred_fallthru
          _
      $region32: #{tpu_custom_call.1} parent=5 // pred_fallthru
        _
      %p223 = scmp.le.s32.totalorder 1, %s19
      %p224 = scmp.lt.s32.totalorder %s19, 3
      %p225 = pnand %p223, %p224
      %p226 = pneg %p225
      // Predicated region
      $region37: #{tpu_custom_call.1} parent=5 // pred_check
        _
      $region38: #{tpu_custom_call.1} parent=5 // pred_check_branch
        %228 = sbr.rel (%p225) target = $region40
      $region39: #{tpu_custom_call.1} parent=5 // pred_region
        %s229 = ssub.s32 %s19, 1
        %s230 = sand.u32 %s32, 1
        %s231 = scalar_lea.sflag [#allocation3], %s230
        %s232 = sand.u32 %s32, 1
        %s233 = smul.addr %s232, 128
        %s234 = scalar_lea.vmem [#allocation2], %s233
        // Predicated region
        $region41: #{tpu_custom_call.1} parent=39 // pred_check
          %p235 = pneg %p45
        $region42: #{tpu_custom_call.1} parent=39 // pred_check_branch
          %237 = sbr.rel (%p235) target = $region44
        $region43: #{tpu_custom_call.1} parent=39 // pred_region
          %238 = dma.done %s231, 2048
        $region44: #{tpu_custom_call.1} parent=39 // pred_fallthru
          _
        // Predicated region
        $region45: #{tpu_custom_call.1} parent=39 // pred_check
          %p239 = pneg %p66
        $region46: #{tpu_custom_call.1} parent=39 // pred_check_branch
          %241 = sbr.rel (%p239) target = $region48
        $region47: #{tpu_custom_call.1} parent=39 // pred_region
          %242 = dma.done [#allocation7], 64
        $region48: #{tpu_custom_call.1} parent=39 // pred_fallthru
          _
        // Predicated region
        $region49: #{tpu_custom_call.1} parent=39 // pred_check
          %p243 = pneg %p87
        $region50: #{tpu_custom_call.1} parent=39 // pred_check_branch
          %245 = sbr.rel (%p243) target = $region52
        $region51: #{tpu_custom_call.1} parent=39 // pred_region
          %246 = dma.done [#allocation5], 16
        $region52: #{tpu_custom_call.1} parent=39 // pred_fallthru
          _
        %247 = sfence
        %s248 = sand.u32 %s32, 1
        %s249 = scalar_lea.sflag [#allocation3], %s248
        %s250 = sand.u32 %s32, 1
        %s251 = smul.addr %s250, 128
        %s252 = scalar_lea.vmem [#allocation2], %s251
        %p253 = pneg %p45
        %p254 = pneg %p42
        %p255 = pneg %p66
        %p256 = pneg %p63
        %p257 = pneg %p87
        %p258 = pneg %p84
        %p259 = pneg %p108
        %p260 = pneg %p105
        %p261 = pneg %p129
        %p262 = pneg %p126
        %p263 = pneg %p155
        %p264 = pneg %p152
        %s265 = sand.u32 %s142, 1
        %s266 = scalar_lea.sflag [#allocation4], %s265
        %s267 = sand.u32 %s142, 1
        %s268 = smul.addr %s267, 128
        %s269 = scalar_lea.vmem [#allocation9], %s268
        %s270 = smul.u32 16, %s24
        %s271 = smul.u32 16, %s24
        %v272 = vld [vmem:[%s234] sm:$0xff]
        %v273 = vld [vmem:[%s234 + $0x8] sm:$0xff]
        %v274 = vld [vmem:[%s234 + $0x10] sm:$0xff]
        %v275 = vld [vmem:[%s234 + $0x18] sm:$0xff]
        %v276 = vld [vmem:[%s234 + $0x20] sm:$0xff]
        %v277 = vld [vmem:[%s234 + $0x28] sm:$0xff]
        %v278 = vld [vmem:[%s234 + $0x30] sm:$0xff]
        %v279 = vld [vmem:[%s234 + $0x38] sm:$0xff]
        %v280 = vld [vmem:[%s234 + $0x40] sm:$0xff]
        %v281 = vld [vmem:[%s234 + $0x48] sm:$0xff]
        %v282 = vld [vmem:[%s234 + $0x50] sm:$0xff]
        %v283 = vld [vmem:[%s234 + $0x58] sm:$0xff]
        %v284 = vld [vmem:[%s234 + $0x60] sm:$0xff]
        %v285 = vld [vmem:[%s234 + $0x68] sm:$0xff]
        %v286 = vld [vmem:[%s234 + $0x70] sm:$0xff]
        %v287 = vld [vmem:[%s234 + $0x78] sm:$0xff]
        %v288 = vld [vmem:[#allocation6] sm:$0x7]
        %v289 = vld [vmem:[%s3] sm:$0x7]
        %v290 = vlaneseq
        %v291 = vshrl.u32 %v290, 7
        %v292 = vsub.s32 0, %v291
        %v293 = vrot.slane %v288, %v292
        %v294 = vmul.f32 %v272, %v293
        %v295 = vmul.f32 %v273, %v293
        %v296 = vmul.f32 %v274, %v293
        %v297 = vmul.f32 %v275, %v293
        %v298 = vmul.f32 %v276, %v293
        %v299 = vmul.f32 %v277, %v293
        %v300 = vmul.f32 %v278, %v293
        %v301 = vmul.f32 %v279, %v293
        %v302 = vmul.f32 %v280, %v293
        %v303 = vmul.f32 %v281, %v293
        %v304 = vmul.f32 %v282, %v293
        %v305 = vmul.f32 %v283, %v293
        %v306 = vmul.f32 %v284, %v293
        %v307 = vmul.f32 %v285, %v293
        %v308 = vmul.f32 %v286, %v293
        %v309 = vmul.f32 %v287, %v293
        %310 = vadd.xlane.f32.xlu0 %v294
        %v311 = vpop.xlane.xlu0 %310
        %312 = vadd.xlane.f32.xlu0 %v295
        %v313 = vpop.xlane.xlu0 %312
        %314 = vadd.xlane.f32.xlu0 %v296
        %v315 = vpop.xlane.xlu0 %314
        %316 = vadd.xlane.f32.xlu0 %v297
        %v317 = vpop.xlane.xlu0 %316
        %318 = vadd.xlane.f32.xlu0 %v298
        %v319 = vpop.xlane.xlu0 %318
        %320 = vadd.xlane.f32.xlu0 %v299
        %v321 = vpop.xlane.xlu0 %320
        %322 = vadd.xlane.f32.xlu0 %v300
        %v323 = vpop.xlane.xlu0 %322
        %324 = vadd.xlane.f32.xlu0 %v301
        %v325 = vpop.xlane.xlu0 %324
        %326 = vadd.xlane.f32.xlu0 %v302
        %v327 = vpop.xlane.xlu0 %326
        %328 = vadd.xlane.f32.xlu0 %v303
        %v329 = vpop.xlane.xlu0 %328
        %330 = vadd.xlane.f32.xlu0 %v304
        %v331 = vpop.xlane.xlu0 %330
        %332 = vadd.xlane.f32.xlu0 %v305
        %v333 = vpop.xlane.xlu0 %332
        %334 = vadd.xlane.f32.xlu0 %v306
        %v335 = vpop.xlane.xlu0 %334
        %336 = vadd.xlane.f32.xlu0 %v307
        %v337 = vpop.xlane.xlu0 %336
        %338 = vadd.xlane.f32.xlu0 %v308
        %v339 = vpop.xlane.xlu0 %338
        %340 = vadd.xlane.f32.xlu0 %v309
        %v341 = vpop.xlane.xlu0 %340
        %s342 = sld [smem:[#allocation8]]
        %v343 = vstv %s342
        %v344 = vadd.f32 %v311, %v343
        %v345 = vadd.f32 %v313, %v343
        %v346 = vadd.f32 %v315, %v343
        %v347 = vadd.f32 %v317, %v343
        %v348 = vadd.f32 %v319, %v343
        %v349 = vadd.f32 %v321, %v343
        %v350 = vadd.f32 %v323, %v343
        %v351 = vadd.f32 %v325, %v343
        %v352 = vadd.f32 %v327, %v343
        %v353 = vadd.f32 %v329, %v343
        %v354 = vadd.f32 %v331, %v343
        %v355 = vadd.f32 %v333, %v343
        %v356 = vadd.f32 %v335, %v343
        %v357 = vadd.f32 %v337, %v343
        %v358 = vadd.f32 %v339, %v343
        %v359 = vadd.f32 %v341, %v343
        %v360 = vlaneseq
        %v361 = vshrl.u32 %v360, 7
        %v362 = vsub.s32 0, %v361
        %v363 = vrot.slane %v289, %v362
        %v364 = vmul.f32 %v344, %v363
        %v365 = vmul.f32 %v345, %v363
        %v366 = vmul.f32 %v346, %v363
        %v367 = vmul.f32 %v347, %v363
        %v368 = vmul.f32 %v348, %v363
        %v369 = vmul.f32 %v349, %v363
        %v370 = vmul.f32 %v350, %v363
        %v371 = vmul.f32 %v351, %v363
        %v372 = vmul.f32 %v352, %v363
        %v373 = vmul.f32 %v353, %v363
        %v374 = vmul.f32 %v354, %v363
        %v375 = vmul.f32 %v355, %v363
        %v376 = vmul.f32 %v356, %v363
        %v377 = vmul.f32 %v357, %v363
        %v378 = vmul.f32 %v358, %v363
        %v379 = vmul.f32 %v359, %v363
        %v380 = vadd.f32 %v364, 0.0
        %v381 = vadd.f32 %v365, 0.0
        %v382 = vadd.f32 %v366, 0.0
        %v383 = vadd.f32 %v367, 0.0
        %v384 = vadd.f32 %v368, 0.0
        %v385 = vadd.f32 %v369, 0.0
        %v386 = vadd.f32 %v370, 0.0
        %v387 = vadd.f32 %v371, 0.0
        %v388 = vadd.f32 %v372, 0.0
        %v389 = vadd.f32 %v373, 0.0
        %v390 = vadd.f32 %v374, 0.0
        %v391 = vadd.f32 %v375, 0.0
        %v392 = vadd.f32 %v376, 0.0
        %v393 = vadd.f32 %v377, 0.0
        %v394 = vadd.f32 %v378, 0.0
        %v395 = vadd.f32 %v379, 0.0
        %v396 = vlaneseq
        %v397 = vshrl.u32 %v396, 7
        %v398 = vsub.s32 1, %v397
        %v399 = vrot.slane %v288, %v398
        %v400 = vmul.f32 %v272, %v399
        %v401 = vmul.f32 %v273, %v399
        %v402 = vmul.f32 %v274, %v399
        %v403 = vmul.f32 %v275, %v399
        %v404 = vmul.f32 %v276, %v399
        %v405 = vmul.f32 %v277, %v399
        %v406 = vmul.f32 %v278, %v399
        %v407 = vmul.f32 %v279, %v399
        %v408 = vmul.f32 %v280, %v399
        %v409 = vmul.f32 %v281, %v399
        %v410 = vmul.f32 %v282, %v399
        %v411 = vmul.f32 %v283, %v399
        %v412 = vmul.f32 %v284, %v399
        %v413 = vmul.f32 %v285, %v399
        %v414 = vmul.f32 %v286, %v399
        %v415 = vmul.f32 %v287, %v399
        %416 = vadd.xlane.f32.xlu0 %v400
        %v417 = vpop.xlane.xlu0 %416
        %418 = vadd.xlane.f32.xlu0 %v401
        %v419 = vpop.xlane.xlu0 %418
        %420 = vadd.xlane.f32.xlu0 %v402
        %v421 = vpop.xlane.xlu0 %420
        %422 = vadd.xlane.f32.xlu0 %v403
        %v423 = vpop.xlane.xlu0 %422
        %424 = vadd.xlane.f32.xlu0 %v404
        %v425 = vpop.xlane.xlu0 %424
        %426 = vadd.xlane.f32.xlu0 %v405
        %v427 = vpop.xlane.xlu0 %426
        %428 = vadd.xlane.f32.xlu0 %v406
        %v429 = vpop.xlane.xlu0 %428
        %430 = vadd.xlane.f32.xlu0 %v407
        %v431 = vpop.xlane.xlu0 %430
        %432 = vadd.xlane.f32.xlu0 %v408
        %v433 = vpop.xlane.xlu0 %432
        %434 = vadd.xlane.f32.xlu0 %v409
        %v435 = vpop.xlane.xlu0 %434
        %436 = vadd.xlane.f32.xlu0 %v410
        %v437 = vpop.xlane.xlu0 %436
        %438 = vadd.xlane.f32.xlu0 %v411
        %v439 = vpop.xlane.xlu0 %438
        %440 = vadd.xlane.f32.xlu0 %v412
        %v441 = vpop.xlane.xlu0 %440
        %442 = vadd.xlane.f32.xlu0 %v413
        %v443 = vpop.xlane.xlu0 %442
        %444 = vadd.xlane.f32.xlu0 %v414
        %v445 = vpop.xlane.xlu0 %444
        %446 = vadd.xlane.f32.xlu0 %v415
        %v447 = vpop.xlane.xlu0 %446
        %s448 = sld [smem:[#allocation8 + $0x1]]
        %v449 = vstv %s448
        %v450 = vadd.f32 %v417, %v449
        %v451 = vadd.f32 %v419, %v449
        %v452 = vadd.f32 %v421, %v449
        %v453 = vadd.f32 %v423, %v449
        %v454 = vadd.f32 %v425, %v449
        %v455 = vadd.f32 %v427, %v449
        %v456 = vadd.f32 %v429, %v449
        %v457 = vadd.f32 %v431, %v449
        %v458 = vadd.f32 %v433, %v449
        %v459 = vadd.f32 %v435, %v449
        %v460 = vadd.f32 %v437, %v449
        %v461 = vadd.f32 %v439, %v449
        %v462 = vadd.f32 %v441, %v449
        %v463 = vadd.f32 %v443, %v449
        %v464 = vadd.f32 %v445, %v449
        %v465 = vadd.f32 %v447, %v449
        %v466 = vlaneseq
        %v467 = vshrl.u32 %v466, 7
        %v468 = vsub.s32 1, %v467
        %v469 = vrot.slane %v289, %v468
        %v470 = vmul.f32 %v450, %v469
        %v471 = vmul.f32 %v451, %v469
        %v472 = vmul.f32 %v452, %v469
        %v473 = vmul.f32 %v453, %v469
        %v474 = vmul.f32 %v454, %v469
        %v475 = vmul.f32 %v455, %v469
        %v476 = vmul.f32 %v456, %v469
        %v477 = vmul.f32 %v457, %v469
        %v478 = vmul.f32 %v458, %v469
        %v479 = vmul.f32 %v459, %v469
        %v480 = vmul.f32 %v460, %v469
        %v481 = vmul.f32 %v461, %v469
        %v482 = vmul.f32 %v462, %v469
        %v483 = vmul.f32 %v463, %v469
        %v484 = vmul.f32 %v464, %v469
        %v485 = vmul.f32 %v465, %v469
        %v486 = vadd.f32 %v380, %v470
        %v487 = vadd.f32 %v381, %v471
        %v488 = vadd.f32 %v382, %v472
        %v489 = vadd.f32 %v383, %v473
        %v490 = vadd.f32 %v384, %v474
        %v491 = vadd.f32 %v385, %v475
        %v492 = vadd.f32 %v386, %v476
        %v493 = vadd.f32 %v387, %v477
        %v494 = vadd.f32 %v388, %v478
        %v495 = vadd.f32 %v389, %v479
        %v496 = vadd.f32 %v390, %v480
        %v497 = vadd.f32 %v391, %v481
        %v498 = vadd.f32 %v392, %v482
        %v499 = vadd.f32 %v393, %v483
        %v500 = vadd.f32 %v394, %v484
        %v501 = vadd.f32 %v395, %v485
        %v502 = vlaneseq
        %v503 = vshrl.u32 %v502, 7
        %v504 = vsub.s32 2, %v503
        %v505 = vrot.slane %v288, %v504
        %v506 = vmul.f32 %v272, %v505
        %v507 = vmul.f32 %v273, %v505
        %v508 = vmul.f32 %v274, %v505
        %v509 = vmul.f32 %v275, %v505
        %v510 = vmul.f32 %v276, %v505
        %v511 = vmul.f32 %v277, %v505
        %v512 = vmul.f32 %v278, %v505
        %v513 = vmul.f32 %v279, %v505
        %v514 = vmul.f32 %v280, %v505
        %v515 = vmul.f32 %v281, %v505
        %v516 = vmul.f32 %v282, %v505
        %v517 = vmul.f32 %v283, %v505
        %v518 = vmul.f32 %v284, %v505
        %v519 = vmul.f32 %v285, %v505
        %v520 = vmul.f32 %v286, %v505
        %v521 = vmul.f32 %v287, %v505
        %522 = vadd.xlane.f32.xlu0 %v506
        %v523 = vpop.xlane.xlu0 %522
        %524 = vadd.xlane.f32.xlu0 %v507
        %v525 = vpop.xlane.xlu0 %524
        %526 = vadd.xlane.f32.xlu0 %v508
        %v527 = vpop.xlane.xlu0 %526
        %528 = vadd.xlane.f32.xlu0 %v509
        %v529 = vpop.xlane.xlu0 %528
        %530 = vadd.xlane.f32.xlu0 %v510
        %v531 = vpop.xlane.xlu0 %530
        %532 = vadd.xlane.f32.xlu0 %v511
        %v533 = vpop.xlane.xlu0 %532
        %534 = vadd.xlane.f32.xlu0 %v512
        %v535 = vpop.xlane.xlu0 %534
        %536 = vadd.xlane.f32.xlu0 %v513
        %v537 = vpop.xlane.xlu0 %536
        %538 = vadd.xlane.f32.xlu0 %v514
        %v539 = vpop.xlane.xlu0 %538
        %540 = vadd.xlane.f32.xlu0 %v515
        %v541 = vpop.xlane.xlu0 %540
        %542 = vadd.xlane.f32.xlu0 %v516
        %v543 = vpop.xlane.xlu0 %542
        %544 = vadd.xlane.f32.xlu0 %v517
        %v545 = vpop.xlane.xlu0 %544
        %546 = vadd.xlane.f32.xlu0 %v518
        %v547 = vpop.xlane.xlu0 %546
        %548 = vadd.xlane.f32.xlu0 %v519
        %v549 = vpop.xlane.xlu0 %548
        %550 = vadd.xlane.f32.xlu0 %v520
        %v551 = vpop.xlane.xlu0 %550
        %552 = vadd.xlane.f32.xlu0 %v521
        %v553 = vpop.xlane.xlu0 %552
        %s554 = sld [smem:[#allocation8 + $0x2]]
        %v555 = vstv %s554
        %v556 = vadd.f32 %v523, %v555
        %v557 = vadd.f32 %v525, %v555
        %v558 = vadd.f32 %v527, %v555
        %v559 = vadd.f32 %v529, %v555
        %v560 = vadd.f32 %v531, %v555
        %v561 = vadd.f32 %v533, %v555
        %v562 = vadd.f32 %v535, %v555
        %v563 = vadd.f32 %v537, %v555
        %v564 = vadd.f32 %v539, %v555
        %v565 = vadd.f32 %v541, %v555
        %v566 = vadd.f32 %v543, %v555
        %v567 = vadd.f32 %v545, %v555
        %v568 = vadd.f32 %v547, %v555
        %v569 = vadd.f32 %v549, %v555
        %v570 = vadd.f32 %v551, %v555
        %v571 = vadd.f32 %v553, %v555
        %v572 = vlaneseq
        %v573 = vshrl.u32 %v572, 7
        %v574 = vsub.s32 2, %v573
        %v575 = vrot.slane %v289, %v574
        %v576 = vmul.f32 %v556, %v575
        %v577 = vmul.f32 %v557, %v575
        %v578 = vmul.f32 %v558, %v575
        %v579 = vmul.f32 %v559, %v575
        %v580 = vmul.f32 %v560, %v575
        %v581 = vmul.f32 %v561, %v575
        %v582 = vmul.f32 %v562, %v575
        %v583 = vmul.f32 %v563, %v575
        %v584 = vmul.f32 %v564, %v575
        %v585 = vmul.f32 %v565, %v575
        %v586 = vmul.f32 %v566, %v575
        %v587 = vmul.f32 %v567, %v575
        %v588 = vmul.f32 %v568, %v575
        %v589 = vmul.f32 %v569, %v575
        %v590 = vmul.f32 %v570, %v575
        %v591 = vmul.f32 %v571, %v575
        %v592 = vadd.f32 %v486, %v576
        %v593 = vadd.f32 %v487, %v577
        %v594 = vadd.f32 %v488, %v578
        %v595 = vadd.f32 %v489, %v579
        %v596 = vadd.f32 %v490, %v580
        %v597 = vadd.f32 %v491, %v581
        %v598 = vadd.f32 %v492, %v582
        %v599 = vadd.f32 %v493, %v583
        %v600 = vadd.f32 %v494, %v584
        %v601 = vadd.f32 %v495, %v585
        %v602 = vadd.f32 %v496, %v586
        %v603 = vadd.f32 %v497, %v587
        %v604 = vadd.f32 %v498, %v588
        %v605 = vadd.f32 %v499, %v589
        %v606 = vadd.f32 %v500, %v590
        %v607 = vadd.f32 %v501, %v591
        %v608 = vld [vmem:[%s4] sm:$0x1]
        %v610 = vlaneseq
        %v611 = vshrl.u32 %v610, 7
        %v612 = vsub.s32 0, %v611
        %v613 = vrot.slane %v608, %v612
        %v615 = vadd.f32 %v592, %v613
        %v616 = vadd.f32 %v593, %v613
        %v617 = vadd.f32 %v594, %v613
        %v618 = vadd.f32 %v595, %v613
        %v619 = vadd.f32 %v596, %v613
        %v620 = vadd.f32 %v597, %v613
        %v621 = vadd.f32 %v598, %v613
        %v622 = vadd.f32 %v599, %v613
        %v623 = vadd.f32 %v600, %v613
        %v624 = vadd.f32 %v601, %v613
        %v625 = vadd.f32 %v602, %v613
        %v626 = vadd.f32 %v603, %v613
        %v627 = vadd.f32 %v604, %v613
        %v628 = vadd.f32 %v605, %v613
        %v629 = vadd.f32 %v606, %v613
        %v630 = vadd.f32 %v607, %v613
        %631 = vst [vmem:[%s269] sm:$0xff] %v615
        %632 = vst [vmem:[%s269 + $0x8] sm:$0xff] %v616
        %633 = vst [vmem:[%s269 + $0x10] sm:$0xff] %v617
        %634 = vst [vmem:[%s269 + $0x18] sm:$0xff] %v618
        %635 = vst [vmem:[%s269 + $0x20] sm:$0xff] %v619
        %636 = vst [vmem:[%s269 + $0x28] sm:$0xff] %v620
        %637 = vst [vmem:[%s269 + $0x30] sm:$0xff] %v621
        %638 = vst [vmem:[%s269 + $0x38] sm:$0xff] %v622
        %639 = vst [vmem:[%s269 + $0x40] sm:$0xff] %v623
        %640 = vst [vmem:[%s269 + $0x48] sm:$0xff] %v624
        %641 = vst [vmem:[%s269 + $0x50] sm:$0xff] %v625
        %642 = vst [vmem:[%s269 + $0x58] sm:$0xff] %v626
        %643 = vst [vmem:[%s269 + $0x60] sm:$0xff] %v627
        %644 = vst [vmem:[%s269 + $0x68] sm:$0xff] %v628
        %645 = vst [vmem:[%s269 + $0x70] sm:$0xff] %v629
        %646 = vst [vmem:[%s269 + $0x78] sm:$0xff] %v630
        %s647 = sand.u32 %s142, 1
        %s648 = scalar_lea.sflag [#allocation4], %s647
        %s649 = sand.u32 %s142, 1
        %s650 = smul.addr %s649, 128
        %s651 = scalar_lea.vmem [#allocation9], %s650
        // Predicated region
        $region53: #{tpu_custom_call.1} parent=39 // pred_check
          %p652 = pneg %p152
        $region54: #{tpu_custom_call.1} parent=39 // pred_check_branch
          %654 = sbr.rel (%p652) target = $region56
        $region55: #{tpu_custom_call.1} parent=39 // pred_region
          %s655 = smul.u32 16, %s24
          %s657 = ssub.s32 2048, 2048
          %658 = vsyncadd %s648, %s657
          %s659 = smul.addr %s655, 128
          %s660 = scalar_lea.hbm %s5, %s659
          %s661 = sshll.u32 %s651, 4
          %s662 = int_to_ptr.vmem [resolvable:$true] %s661
          %667 = dma.vmem_to_hbm [thread:$0]  %s662, 2048, %s660, %s648, 128, 128, 8
        $region56: #{tpu_custom_call.1} parent=39 // pred_fallthru
          _
      $region40: #{tpu_custom_call.1} parent=5 // pred_fallthru
        _
      %p668 = scmp.le.s32.totalorder 2, %s19
      // Predicated region
      $region57: #{tpu_custom_call.1} parent=5 // pred_check
        %p669 = pneg %p668
      $region58: #{tpu_custom_call.1} parent=5 // pred_check_branch
        %671 = sbr.rel (%p669) target = $region60
      $region59: #{tpu_custom_call.1} parent=5 // pred_region
        %s672 = ssub.s32 %s19, 2
        // Predicated region
        $region61: #{tpu_custom_call.1} parent=59 // pred_check
          %p673 = pneg %p158
        $region62: #{tpu_custom_call.1} parent=59 // pred_check_branch
          %675 = sbr.rel (%p673) target = $region64
        $region63: #{tpu_custom_call.1} parent=59 // pred_region
          %s676 = sand.u32 %s143, 1
          %s677 = scalar_lea.sflag [#allocation4], %s676
          %s678 = sand.u32 %s143, 1
          %s679 = smul.addr %s678, 128
          %s680 = scalar_lea.vmem [#allocation9], %s679
          %681 = dma.done %s677, 2048
        $region64: #{tpu_custom_call.1} parent=59 // pred_fallthru
          _
      $region60: #{tpu_custom_call.1} parent=5 // pred_fallthru
        _
    $region6: #{tpu_custom_call.1} parent=1 // loop_footer
      %s23 = sadd.s32 1, %s19
    $region7: #{tpu_custom_call.1} parent=1 // loop_footer_branch
      %18 = sbr.rel target = $region3
    $region8: #{tpu_custom_call.1} parent=1 // loop_exit
      _
    %682 = vsyncpa [#allocation3], 1
    %s683 = scalar_lea.sflag [#allocation3], 1
    %684 = vsyncpa %s683, 1
    %685 = vsyncpa [#allocation7], 1
    %686 = vsyncpa [#allocation4], 1
    %s687 = scalar_lea.sflag [#allocation4], 1
    %688 = vsyncpa %s687, 1
    %689 = vsyncpa [#allocation5], 1
    %s690 = scalar_lea.sflag [#allocation5], 1
    %691 = vsyncpa %s690, 1

</llo_original>
